<compile_context>
chip_gen: v6e
topology: v6e:2x2x1
jax: 0.10.0
libtpu: 0.0.40
codegen_flags: <defaults>
</compile_context>

<pallas_src>
import numpy as np
import jax
import jax.numpy as jnp
from jax.experimental import pallas as pl
from jax.experimental.pallas import tpu as pltpu

# ----------------------- synthetic tree configuration -----------------------
NUM_CLASSES = 8                 # leaves
NUM_INODES = NUM_CLASSES - 1    # internal nodes of a perfect binary tree
DEPTH = 3                       # root -> leaf depth
C_IN = 4
H = W = 16
B = 2

NI_PAD = max(8, (NUM_INODES + 7) // 8 * 8)          # sublane-aligned node axis
NC_PAD = max(128, (NUM_CLASSES + 127) // 128 * 128)  # lane-dense class axis
TILE_B_MAX = 512                                     # sized for v7x 64 MiB VMEM


def _round_up(x, m):
    return (x + m - 1) // m * m


def build_tree_tables():
    """Perfect binary tree over NUM_CLASSES classes (BFS node numbering).

    Returns:
      D:        (NUM_CLASSES, NUM_INODES) f32 jnp "margin" matrix s.t.
                logits @ D = (right-child mean) - (left-child mean) per node;
                sign == per-node hard argmax of get_node_logits.
      S:        (NI_PAD, NC_PAD) f32 jnp path-sign matrix (see header).
      path_len: (1, NC_PAD) f32 jnp, number of ancestors per class in the first
                NUM_CLASSES lanes, -1 in the padding lanes (never matched).
      M_pair:   (NUM_CLASSES, 2*NUM_INODES) numpy interleaved per-child mean
                matrix (reference path only, mirrors get_node_logits exactly).
      children_np: (NUM_INODES, 2) numpy children table (reference path only).
    """
    spans = {0: (0, NUM_CLASSES)}
    children = [None] * NUM_INODES
    groups = [None] * NUM_INODES
    next_id, n = 1, 0
    frontier = [0]
    while n < len(frontier):
        node = frontier[n]
        lo, hi = spans[node]
        mid = (lo + hi) // 2
        g = [list(range(lo, mid)), list(range(mid, hi))]
        groups[node] = g
        ch = []
        for grp in g:
            if len(grp) == 1:
                ch.append(NUM_INODES + grp[0])        # leaf code
            else:
                spans[next_id] = (grp[0], grp[-1] + 1)
                frontier.append(next_id)
                ch.append(next_id)
                next_id += 1
        children[node] = ch
        n += 1

    children_np = np.asarray(children, dtype=np.int64)
    # Invariant flagged in the review: the root (node 0) must never be a child.
    assert not np.any(children_np == 0), "root reappears as a child"

    M_pair = np.zeros((NUM_CLASSES, 2 * NUM_INODES), dtype=np.float32)
    D = np.zeros((NUM_CLASSES, NUM_INODES), dtype=np.float32)
    S = np.zeros((NI_PAD, NC_PAD), dtype=np.float32)
    for node in range(NUM_INODES):
        for j, grp in enumerate(groups[node]):
            sign = 1.0 if j == 1 else -1.0
            for c in grp:
                M_pair[c, 2 * node + j] = 1.0 / len(grp)
                D[c, node] += sign / len(grp)
                S[node, c] = sign

    path_len = np.full((1, NC_PAD), -1.0, dtype=np.float32)
    path_len[0, :NUM_CLASSES] = np.count_nonzero(S[:, :NUM_CLASSES], axis=0)

    return (jnp.asarray(D), jnp.asarray(S), jnp.asarray(path_len),
            M_pair, children_np)


def fuse_params(w, b, D, hw):
    """Fold (global-avg-pool -> classifier -> node aggregation) into one GEMM.

    x.reshape(B, C*HW) @ W_big + b_fused  ==  mean_pool(x) @ W @ D + b @ D
    Padded node columns (NUM_INODES..NI_PAD) are exactly zero.
    """
    wd = jnp.dot(w, D)                                        # (C, NUM_INODES)
    wd = jnp.pad(wd, ((0, 0), (0, NI_PAD - NUM_INODES)))      # (C, NI_PAD)
    w_big = jnp.repeat(wd, hw, axis=0) / float(hw)            # (C*HW, NI_PAD)
    b_fused = jnp.pad(jnp.dot(b, D), (0, NI_PAD - NUM_INODES))
    return w_big, b_fused.reshape(1, NI_PAD).astype(jnp.float32)


# ------------------------------ Pallas kernel -------------------------------
def nbdt_fused_kernel(x_ref, w_ref, b_ref, s_ref, plen_ref, out_ref):
    """Whole NBDT forward for one batch tile.

    x_ref:    (TILE_B, C*H*W)  f32/bf16  flattened NCHW activation (lane-dense)
    w_ref:    (C*H*W, NI_PAD)  f32/bf16  fused pool+classifier+node-agg weight
    b_ref:    (1, NI_PAD)      f32       fused bias
    s_ref:    (NI_PAD, NC_PAD) f32       path-sign matrix
    plen_ref: (1, NC_PAD)      f32       per-class path length (-1 in padding)
    out_ref:  (TILE_B, NC_PAD) f32       one-hot logits in first NUM_CLASSES lanes
    """
    # MXU GEMM: margin[b, n] = right-child-mean - left-child-mean (f32 acc).
    margin = jnp.dot(x_ref[...], w_ref[...],
                     preferred_element_type=jnp.float32) + b_ref[...]
    # Hard per-node decision as a sign; tie -> -1 (left), matching torch
    # first-max argmax.  Padded node columns give -1 but hit zero rows of S.
    signed = jnp.where(margin > 0.0, 1.0, -1.0)               # (TILE_B, NI_PAD)
    # score[b, c] = sum over ancestors of c of (decision sign * path sign);
    # equals path_len[c] iff every decision agrees with c's path => one-hot.
    # Exact small-integer arithmetic in f32, so the equality compare is exact.
    score = jnp.dot(signed, s_ref[...], preferred_element_type=jnp.float32)
    out_ref[...] = (score == plen_ref[...]).astype(jnp.float32)


# --------------------------------- wrapper ----------------------------------
@jax.jit
def nbdt_forward(x_nchw, w_big, b_fused, s_mat, path_len):
    """x_nchw: (B, C, H, W) f32 -> one-hot logits (B, NUM_CLASSES) f32.

    Compute dtype of the main GEMM follows w_big.dtype (pass bf16 weights on
    v6e/v7x); accumulation is always f32.
    """
    bsz = x_nchw.shape[0]
    chw = x_nchw.shape[1] * x_nchw.shape[2] * x_nchw.shape[3]
    ni_pad = w_big.shape[1]
    nc_pad = s_mat.shape[1]

    tile_b = min(TILE_B_MAX, _round_up(bsz, 8))   # f32 sublane multiple
    b_pad = _round_up(bsz, tile_b)

    # Contiguous NCHW flatten (no transpose), cast to the GEMM operand dtype.
    xk = x_nchw.reshape(bsz, chw).astype(w_big.dtype)
    if b_pad != bsz:
        xk = jnp.pad(xk, ((0, b_pad - bsz), (0, 0)))

    itemsize = jnp.dtype(w_big.dtype).itemsize
    cost = pl.CostEstimate(
        flops=2 * b_pad * chw * ni_pad + 2 * b_pad * ni_pad * nc_pad,
        transcendentals=0,
        bytes_accessed=(b_pad * chw * itemsize            # x
                        + chw * ni_pad * itemsize         # W_big (read once)
                        + ni_pad * 4                      # bias
                        + ni_pad * nc_pad * 4             # S
                        + nc_pad * 4                      # path_len
                        + b_pad * nc_pad * 4))            # out

    out = pl.pallas_call(
        nbdt_fused_kernel,
        grid=(b_pad // tile_b,),
        in_specs=[
            # batch-tiled activation
            pl.BlockSpec((tile_b, chw), lambda i: (i, 0)),
            # weight / bias / S / path_len: constant index_map => fetched once,
            # VMEM-resident across all batch steps (key for v5e HBM BW).
            pl.BlockSpec((chw, ni_pad), lambda i: (0, 0)),
            pl.BlockSpec((1, ni_pad), lambda i: (0, 0)),
            pl.BlockSpec((ni_pad, nc_pad), lambda i: (0, 0)),
            pl.BlockSpec((1, nc_pad), lambda i: (0, 0)),
        ],
        # Lane-dense output (last dim 128): unmasked vst stores.
        out_specs=pl.BlockSpec((tile_b, nc_pad), lambda i: (i, 0)),
        out_shape=jax.ShapeDtypeStruct((b_pad, nc_pad), jnp.float32),
        # Batch tiles are independent -> "parallel" lets v7x's two TensorCores
        # split the grid.
        compiler_params=pltpu.CompilerParams(
            dimension_semantics=("parallel",)),
        cost_estimate=cost,
    )(xk, w_big, b_fused, s_mat, path_len)

    return out[:bsz, :NUM_CLASSES]


# ------------------------------ pure-JAX/numpy reference ---------------------
def nbdt_reference(x_nchw, w, b, M_pair, children_np):
    """Mirrors the PyTorch module: pool -> logits -> get_node_logits ->
    per-node argmax -> traverse_tree -> one-hot."""
    pooled = np.asarray(jnp.mean(x_nchw, axis=(2, 3)))                 # (B, C)
    logits = pooled @ np.asarray(w) + np.asarray(b)                    # (B, K)
    nl = (logits @ M_pair).reshape(-1, NUM_INODES, 2)                  # (B, NI, 2)
    preds = np.argmax(nl, axis=-1)                                     # first-max
    cur = np.zeros((pooled.shape[0],), np.int64)
    for _ in range(DEPTH):
        choose = preds[np.arange(cur.shape[0]), cur]
        cur = children_np[cur, choose]
    predicted = cur - NUM_INODES
    return np.eye(NUM_CLASSES, dtype=np.float32)[predicted]


# ----------------------------------- main ------------------------------------
if __name__ == "__main__":
    key = jax.random.PRNGKey(0)
    kx, kw, kb = jax.random.split(key, 3)

    x = jax.random.normal(kx, (B, C_IN, H, W), dtype=jnp.float32)      # NCHW input
    w_cls = 0.1 * jax.random.normal(kw, (C_IN, NUM_CLASSES), jnp.float32)
    b_cls = 0.1 * jax.random.normal(kb, (NUM_CLASSES,), jnp.float32)

    D, S, path_len, M_pair, children_np = build_tree_tables()
    w_big, b_fused = fuse_params(w_cls, b_cls, D, H * W)   # one-time weight fusion

    # --- f32 operands: exact semantic check against the un-fused reference ---
    out_f32 = jax.block_until_ready(nbdt_forward(x, w_big, b_fused, S, path_len))
    out_np = np.asarray(out_f32)
    assert out_np.shape == (B, NUM_CLASSES) and out_f32.dtype == jnp.float32
    assert np.allclose(out_np.sum(axis=1), 1.0)
    assert np.allclose(out_np.max(axis=1), 1.0)
    ref = nbdt_reference(x, w_cls, b_cls, M_pair, children_np)
    assert np.array_equal(out_np, ref), (out_np, ref)

    # --- bf16 operands (v6e/v7x MXU-native, f32 accumulation) ----------------
    # Structural check only: the review notes near-zero node margins could flip
    # a hard decision relative to the f32 reference (tie-window widens in bf16).
    out_bf16 = jax.block_until_ready(
        nbdt_forward(x, w_big.astype(jnp.bfloat16), b_fused, S, path_len))
    ob = np.asarray(out_bf16)
    assert ob.shape == (B, NUM_CLASSES) and out_bf16.dtype == jnp.float32
    assert np.allclose(ob.sum(axis=1), 1.0)
    assert np.allclose(ob.max(axis=1), 1.0)

    print("KERNEL_OK")
</pallas_src>

<mosaic_0001>
module attributes {stable_mosaic.version = 11 : i64} {
  func.func @nbdt_fused_kernel(%arg0: i32, %arg1: memref<8x1024xf32, #tpu.memory_space<vmem>>, %arg2: memref<1024x8xf32, #tpu.memory_space<vmem>>, %arg3: memref<1x8xf32, #tpu.memory_space<vmem>>, %arg4: memref<8x128xf32, #tpu.memory_space<vmem>>, %arg5: memref<1x128xf32, #tpu.memory_space<vmem>>, %arg6: memref<8x128xf32, #tpu.memory_space<vmem>>) attributes {dimension_semantics = [#tpu.dimension_semantics<parallel>], iteration_bounds = array<i64: 1>, scalar_prefetch = 0 : i64, scratch_operands = 0 : i64, tpu.core_type = #tpu.core_type<tc>, window_params = [{transform_indices = @transform_0, window_bounds = array<i64: 8, 1024>}, {pipeline_mode = #tpu.pipeline_mode<synchronous>, transform_indices = @transform_1, window_bounds = array<i64: 1024, 8>}, {pipeline_mode = #tpu.pipeline_mode<synchronous>, transform_indices = @transform_2, window_bounds = array<i64: 1, 8>}, {pipeline_mode = #tpu.pipeline_mode<synchronous>, transform_indices = @transform_3, window_bounds = array<i64: 8, 128>}, {pipeline_mode = #tpu.pipeline_mode<synchronous>, transform_indices = @transform_4, window_bounds = array<i64: 1, 128>}, {transform_indices = @transform_5, window_bounds = array<i64: 8, 128>}]} {
    %c0 = arith.constant 0 : index
    %c0_0 = arith.constant 0 : index
    %0 = vector.load %arg1[%c0, %c0_0] : memref<8x1024xf32, #tpu.memory_space<vmem>>, vector<8x1024xf32>
    %c0_1 = arith.constant 0 : index
    %c0_2 = arith.constant 0 : index
    %1 = vector.load %arg2[%c0_1, %c0_2] : memref<1024x8xf32, #tpu.memory_space<vmem>>, vector<1024x8xf32>
    %cst = arith.constant dense<0.000000e+00> : vector<8x8xf32>
    %2 = tpu.matmul %0, %1, %cst {dimension_numbers = #tpu.dot_dimension_numbers<[1], [0], [0], [1], [0, 0, 1, 1], [], []>} : vector<8x1024xf32>, vector<1024x8xf32>, vector<8x8xf32> -> vector<8x8xf32>
    %c0_3 = arith.constant 0 : index
    %c0_4 = arith.constant 0 : index
    %3 = vector.load %arg3[%c0_3, %c0_4] : memref<1x8xf32, #tpu.memory_space<vmem>>, vector<1x8xf32>
    %4 = vector.broadcast %3 : vector<1x8xf32> to vector<8x8xf32>
    %5 = arith.addf %2, %4 : vector<8x8xf32>
    %cst_5 = arith.constant 0.000000e+00 : f32
    %6 = vector.broadcast %cst_5 : f32 to vector<8x8xf32>
    %7 = arith.cmpf ogt, %5, %6 : vector<8x8xf32>
    %cst_6 = arith.constant 1.000000e+00 : f32
    %cst_7 = arith.constant -1.000000e+00 : f32
    %8 = vector.broadcast %cst_6 : f32 to vector<8x8xf32>
    %9 = vector.broadcast %cst_7 : f32 to vector<8x8xf32>
    %10 = arith.select %7, %8, %9 : vector<8x8xi1>, vector<8x8xf32>
    %c0_8 = arith.constant 0 : index
    %c0_9 = arith.constant 0 : index
    %11 = vector.load %arg4[%c0_8, %c0_9] : memref<8x128xf32, #tpu.memory_space<vmem>>, vector<8x128xf32>
    %cst_10 = arith.constant dense<0.000000e+00> : vector<8x128xf32>
    %12 = tpu.matmul %10, %11, %cst_10 {dimension_numbers = #tpu.dot_dimension_numbers<[1], [0], [0], [1], [0, 0, 1, 1], [], []>} : vector<8x8xf32>, vector<8x128xf32>, vector<8x128xf32> -> vector<8x128xf32>
    %c0_11 = arith.constant 0 : index
    %c0_12 = arith.constant 0 : index
    %13 = vector.load %arg5[%c0_11, %c0_12] : memref<1x128xf32, #tpu.memory_space<vmem>>, vector<1x128xf32>
    %14 = vector.broadcast %13 : vector<1x128xf32> to vector<8x128xf32>
    %15 = arith.cmpf oeq, %12, %14 : vector<8x128xf32>
    %16 = arith.extui %15 : vector<8x128xi1> to vector<8x128xi32>
    %17 = arith.sitofp %16 : vector<8x128xi32> to vector<8x128xf32>
    %c0_13 = arith.constant 0 : index
    %c0_14 = arith.constant 0 : index
    %18 = vector.load %arg6[%c0_13, %c0_14] : memref<8x128xf32, #tpu.memory_space<vmem>>, vector<8x128xf32>
    tpu.vector_store %arg6[%c0_13, %c0_14], %17 {strides = array<i32>} : memref<8x128xf32, #tpu.memory_space<vmem>>, vector<8x128xf32>,
    return
  }
  func.func @transform_0(%arg0: i32) -> (i32, i32) {
    %c0_i32 = arith.constant 0 : i32
    %c0_i32_0 = arith.constant 0 : i32
    return %arg0, %c0_i32 : i32, i32
  }
  func.func @transform_1(%arg0: i32) -> (i32, i32) {
    %c0_i32 = arith.constant 0 : i32
    %c0_i32_0 = arith.constant 0 : i32
    %c0_i32_1 = arith.constant 0 : i32
    return %c0_i32, %c0_i32_0 : i32, i32
  }
  func.func @transform_2(%arg0: i32) -> (i32, i32) {
    %c0_i32 = arith.constant 0 : i32
    %c0_i32_0 = arith.constant 0 : i32
    %c0_i32_1 = arith.constant 0 : i32
    return %c0_i32, %c0_i32_0 : i32, i32
  }
  func.func @transform_3(%arg0: i32) -> (i32, i32) {
    %c0_i32 = arith.constant 0 : i32
    %c0_i32_0 = arith.constant 0 : i32
    %c0_i32_1 = arith.constant 0 : i32
    return %c0_i32, %c0_i32_0 : i32, i32
  }
  func.func @transform_4(%arg0: i32) -> (i32, i32) {
    %c0_i32 = arith.constant 0 : i32
    %c0_i32_0 = arith.constant 0 : i32
    %c0_i32_1 = arith.constant 0 : i32
    return %c0_i32, %c0_i32_0 : i32, i32
  }
  func.func @transform_5(%arg0: i32) -> (i32, i32) {
    %c0_i32 = arith.constant 0 : i32
    %c0_i32_0 = arith.constant 0 : i32
    return %arg0, %c0_i32 : i32, i32
  }
}

</mosaic_0001>

<llo_original>
// kernel: nbdt_forward.1
$region0: #{nbdt_forward.1}
  #allocation0 [shape = 'u32[]', space=smem, size = 0x4, offset = 0x4, fixed_abs, tag = 'smem constant byte address 0x4 - core index']
  #allocation1 [shape = 'u32[144,128]{1,0:T(1,128)}', space=vmem, size = 0x12000, scoped, tag = 'internal scratch']
  %s0 = inlined_call_operand.vmem [shape: f32[8,1024], index: 0, kind: input, shape index: {}]
  %s1 = inlined_call_operand.vmem [shape: f32[1024,8], index: 1, kind: input, shape index: {}]
  %s2 = inlined_call_operand.vmem [shape: f32[1,8], index: 2, kind: input, shape index: {}]
  %s3 = inlined_call_operand.vmem [shape: f32[8,128], index: 3, kind: input, shape index: {}]
  %s4 = inlined_call_operand.vmem [shape: f32[1,128], index: 4, kind: input, shape index: {}]
  %s5 = inlined_call_operand.vmem [shape: f32[8,128], index: 5, kind: output, shape index: {}]
  %s6 = sld [smem:[#allocation0]]
  $region30: #{nbdt_forward.1} parent=0
    _
  %s8 = ssub.s32 1, %s6
  %s9 = scalar_select 0, %s8, %s6
  // Predicated region
  $region2: #{nbdt_forward.1} parent=0 // pred_check
    _
  $region3: #{nbdt_forward.1} parent=0 // pred_check_branch
    %11 = sbr.rel (0) target = $region5
  $region4: #{nbdt_forward.1} parent=0 // pred_region
    _
  $region5: #{nbdt_forward.1} parent=0 // pred_fallthru
    _
  // Predicated region
  $region6: #{nbdt_forward.1} parent=0 // pred_check
    _
  $region7: #{nbdt_forward.1} parent=0 // pred_check_branch
    %13 = sbr.rel (0) target = $region9
  $region8: #{nbdt_forward.1} parent=0 // pred_region
    _
  $region9: #{nbdt_forward.1} parent=0 // pred_fallthru
    _
  // Predicated region
  $region10: #{nbdt_forward.1} parent=0 // pred_check
    _
  $region11: #{nbdt_forward.1} parent=0 // pred_check_branch
    %15 = sbr.rel (0) target = $region13
  $region12: #{nbdt_forward.1} parent=0 // pred_region
    _
  $region13: #{nbdt_forward.1} parent=0 // pred_fallthru
    _
  // Predicated region
  $region14: #{nbdt_forward.1} parent=0 // pred_check
    _
  $region15: #{nbdt_forward.1} parent=0 // pred_check_branch
    %17 = sbr.rel (0) target = $region17
  $region16: #{nbdt_forward.1} parent=0 // pred_region
    _
  $region17: #{nbdt_forward.1} parent=0 // pred_fallthru
    _
  // Predicated region
  $region18: #{nbdt_forward.1} parent=0 // pred_check
    _
  $region19: #{nbdt_forward.1} parent=0 // pred_check_branch
    %19 = sbr.rel (0) target = $region21
  $region20: #{nbdt_forward.1} parent=0 // pred_region
    _
  $region21: #{nbdt_forward.1} parent=0 // pred_fallthru
    _
  %v20 = vld [vmem:[%s0] sm:$0xff]
  %v21 = vld [vmem:[%s0 + $0x8] sm:$0xff]
  %v22 = vld [vmem:[%s0 + $0x10] sm:$0xff]
  %v23 = vld [vmem:[%s0 + $0x18] sm:$0xff]
  %v24 = vld [vmem:[%s0 + $0x20] sm:$0xff]
  %v25 = vld [vmem:[%s0 + $0x28] sm:$0xff]
  %v26 = vld [vmem:[%s0 + $0x30] sm:$0xff]
  %v27 = vld [vmem:[%s0 + $0x38] sm:$0xff]
  %v28 = vld [vmem:[%s1] sm:$0xff]
  %v29 = vld [vmem:[%s1 + $0x8] sm:$0xff]
  %v30 = vld [vmem:[%s1 + $0x10] sm:$0xff]
  %v31 = vld [vmem:[%s1 + $0x18] sm:$0xff]
  %v32 = vld [vmem:[%s1 + $0x20] sm:$0xff]
  %v33 = vld [vmem:[%s1 + $0x28] sm:$0xff]
  %v34 = vld [vmem:[%s1 + $0x30] sm:$0xff]
  %v35 = vld [vmem:[%s1 + $0x38] sm:$0xff]
  %v36 = vld [vmem:[%s1 + $0x40] sm:$0xff]
  %v37 = vld [vmem:[%s1 + $0x48] sm:$0xff]
  %v38 = vld [vmem:[%s1 + $0x50] sm:$0xff]
  %v39 = vld [vmem:[%s1 + $0x58] sm:$0xff]
  %v40 = vld [vmem:[%s1 + $0x60] sm:$0xff]
  %v41 = vld [vmem:[%s1 + $0x68] sm:$0xff]
  %v42 = vld [vmem:[%s1 + $0x70] sm:$0xff]
  %v43 = vld [vmem:[%s1 + $0x78] sm:$0xff]
  %v44 = vld [vmem:[%s1 + $0x80] sm:$0xff]
  %v45 = vld [vmem:[%s1 + $0x88] sm:$0xff]
  %v46 = vld [vmem:[%s1 + $0x90] sm:$0xff]
  %v47 = vld [vmem:[%s1 + $0x98] sm:$0xff]
  %v48 = vld [vmem:[%s1 + $0xa0] sm:$0xff]
  %v49 = vld [vmem:[%s1 + $0xa8] sm:$0xff]
  %v50 = vld [vmem:[%s1 + $0xb0] sm:$0xff]
  %v51 = vld [vmem:[%s1 + $0xb8] sm:$0xff]
  %v52 = vld [vmem:[%s1 + $0xc0] sm:$0xff]
  %v53 = vld [vmem:[%s1 + $0xc8] sm:$0xff]
  %v54 = vld [vmem:[%s1 + $0xd0] sm:$0xff]
  %v55 = vld [vmem:[%s1 + $0xd8] sm:$0xff]
  %v56 = vld [vmem:[%s1 + $0xe0] sm:$0xff]
  %v57 = vld [vmem:[%s1 + $0xe8] sm:$0xff]
  %v58 = vld [vmem:[%s1 + $0xf0] sm:$0xff]
  %v59 = vld [vmem:[%s1 + $0xf8] sm:$0xff]
  %v60 = vld [vmem:[%s1 + $0x100] sm:$0xff]
  %v61 = vld [vmem:[%s1 + $0x108] sm:$0xff]
  %v62 = vld [vmem:[%s1 + $0x110] sm:$0xff]
  %v63 = vld [vmem:[%s1 + $0x118] sm:$0xff]
  %v64 = vld [vmem:[%s1 + $0x120] sm:$0xff]
  %v65 = vld [vmem:[%s1 + $0x128] sm:$0xff]
  %v66 = vld [vmem:[%s1 + $0x130] sm:$0xff]
  %v67 = vld [vmem:[%s1 + $0x138] sm:$0xff]
  %v68 = vld [vmem:[%s1 + $0x140] sm:$0xff]
  %v69 = vld [vmem:[%s1 + $0x148] sm:$0xff]
  %v70 = vld [vmem:[%s1 + $0x150] sm:$0xff]
  %v71 = vld [vmem:[%s1 + $0x158] sm:$0xff]
  %v72 = vld [vmem:[%s1 + $0x160] sm:$0xff]
  %v73 = vld [vmem:[%s1 + $0x168] sm:$0xff]
  %v74 = vld [vmem:[%s1 + $0x170] sm:$0xff]
  %v75 = vld [vmem:[%s1 + $0x178] sm:$0xff]
  %v76 = vld [vmem:[%s1 + $0x180] sm:$0xff]
  %v77 = vld [vmem:[%s1 + $0x188] sm:$0xff]
  %v78 = vld [vmem:[%s1 + $0x190] sm:$0xff]
  %v79 = vld [vmem:[%s1 + $0x198] sm:$0xff]
  %v80 = vld [vmem:[%s1 + $0x1a0] sm:$0xff]
  %v81 = vld [vmem:[%s1 + $0x1a8] sm:$0xff]
  %v82 = vld [vmem:[%s1 + $0x1b0] sm:$0xff]
  %v83 = vld [vmem:[%s1 + $0x1b8] sm:$0xff]
  %v84 = vld [vmem:[%s1 + $0x1c0] sm:$0xff]
  %v85 = vld [vmem:[%s1 + $0x1c8] sm:$0xff]
  %v86 = vld [vmem:[%s1 + $0x1d0] sm:$0xff]
  %v87 = vld [vmem:[%s1 + $0x1d8] sm:$0xff]
  %v88 = vld [vmem:[%s1 + $0x1e0] sm:$0xff]
  %v89 = vld [vmem:[%s1 + $0x1e8] sm:$0xff]
  %v90 = vld [vmem:[%s1 + $0x1f0] sm:$0xff]
  %v91 = vld [vmem:[%s1 + $0x1f8] sm:$0xff]
  %v92 = vld [vmem:[%s1 + $0x200] sm:$0xff]
  %v93 = vld [vmem:[%s1 + $0x208] sm:$0xff]
  %v94 = vld [vmem:[%s1 + $0x210] sm:$0xff]
  %v95 = vld [vmem:[%s1 + $0x218] sm:$0xff]
  %v96 = vld [vmem:[%s1 + $0x220] sm:$0xff]
  %v97 = vld [vmem:[%s1 + $0x228] sm:$0xff]
  %v98 = vld [vmem:[%s1 + $0x230] sm:$0xff]
  %v99 = vld [vmem:[%s1 + $0x238] sm:$0xff]
  %v100 = vld [vmem:[%s1 + $0x240] sm:$0xff]
  %v101 = vld [vmem:[%s1 + $0x248] sm:$0xff]
  %v102 = vld [vmem:[%s1 + $0x250] sm:$0xff]
  %v103 = vld [vmem:[%s1 + $0x258] sm:$0xff]
  %v104 = vld [vmem:[%s1 + $0x260] sm:$0xff]
  %v105 = vld [vmem:[%s1 + $0x268] sm:$0xff]
  %v106 = vld [vmem:[%s1 + $0x270] sm:$0xff]
  %v107 = vld [vmem:[%s1 + $0x278] sm:$0xff]
  %v108 = vld [vmem:[%s1 + $0x280] sm:$0xff]
  %v109 = vld [vmem:[%s1 + $0x288] sm:$0xff]
  %v110 = vld [vmem:[%s1 + $0x290] sm:$0xff]
  %v111 = vld [vmem:[%s1 + $0x298] sm:$0xff]
  %v112 = vld [vmem:[%s1 + $0x2a0] sm:$0xff]
  %v113 = vld [vmem:[%s1 + $0x2a8] sm:$0xff]
  %v114 = vld [vmem:[%s1 + $0x2b0] sm:$0xff]
  %v115 = vld [vmem:[%s1 + $0x2b8] sm:$0xff]
  %v116 = vld [vmem:[%s1 + $0x2c0] sm:$0xff]
  %v117 = vld [vmem:[%s1 + $0x2c8] sm:$0xff]
  %v118 = vld [vmem:[%s1 + $0x2d0] sm:$0xff]
  %v119 = vld [vmem:[%s1 + $0x2d8] sm:$0xff]
  %v120 = vld [vmem:[%s1 + $0x2e0] sm:$0xff]
  %v121 = vld [vmem:[%s1 + $0x2e8] sm:$0xff]
  %v122 = vld [vmem:[%s1 + $0x2f0] sm:$0xff]
  %v123 = vld [vmem:[%s1 + $0x2f8] sm:$0xff]
  %v124 = vld [vmem:[%s1 + $0x300] sm:$0xff]
  %v125 = vld [vmem:[%s1 + $0x308] sm:$0xff]
  %v126 = vld [vmem:[%s1 + $0x310] sm:$0xff]
  %v127 = vld [vmem:[%s1 + $0x318] sm:$0xff]
  %v128 = vld [vmem:[%s1 + $0x320] sm:$0xff]
  %v129 = vld [vmem:[%s1 + $0x328] sm:$0xff]
  %v130 = vld [vmem:[%s1 + $0x330] sm:$0xff]
  %v131 = vld [vmem:[%s1 + $0x338] sm:$0xff]
  %v132 = vld [vmem:[%s1 + $0x340] sm:$0xff]
  %v133 = vld [vmem:[%s1 + $0x348] sm:$0xff]
  %v134 = vld [vmem:[%s1 + $0x350] sm:$0xff]
  %v135 = vld [vmem:[%s1 + $0x358] sm:$0xff]
  %v136 = vld [vmem:[%s1 + $0x360] sm:$0xff]
  %v137 = vld [vmem:[%s1 + $0x368] sm:$0xff]
  %v138 = vld [vmem:[%s1 + $0x370] sm:$0xff]
  %v139 = vld [vmem:[%s1 + $0x378] sm:$0xff]
  %v140 = vld [vmem:[%s1 + $0x380] sm:$0xff]
  %v141 = vld [vmem:[%s1 + $0x388] sm:$0xff]
  %v142 = vld [vmem:[%s1 + $0x390] sm:$0xff]
  %v143 = vld [vmem:[%s1 + $0x398] sm:$0xff]
  %v144 = vld [vmem:[%s1 + $0x3a0] sm:$0xff]
  %v145 = vld [vmem:[%s1 + $0x3a8] sm:$0xff]
  %v146 = vld [vmem:[%s1 + $0x3b0] sm:$0xff]
  %v147 = vld [vmem:[%s1 + $0x3b8] sm:$0xff]
  %v148 = vld [vmem:[%s1 + $0x3c0] sm:$0xff]
  %v149 = vld [vmem:[%s1 + $0x3c8] sm:$0xff]
  %v150 = vld [vmem:[%s1 + $0x3d0] sm:$0xff]
  %v151 = vld [vmem:[%s1 + $0x3d8] sm:$0xff]
  %v152 = vld [vmem:[%s1 + $0x3e0] sm:$0xff]
  %v153 = vld [vmem:[%s1 + $0x3e8] sm:$0xff]
  %v154 = vld [vmem:[%s1 + $0x3f0] sm:$0xff]
  %v155 = vld [vmem:[%s1 + $0x3f8] sm:$0xff]
  %v156 = vld [vmem:[%s2] sm:$0x1]
  %v158 = vlaneseq
  %v159 = vshrl.u32 %v158, 7
  %v160 = vsub.s32 0, %v159
  %v161 = vrot.slane %v156, %v160
  %163 = vmatprep.subr.mxu0 0.0
  %164 = vmatpush1.msra.mxu0 %v43
  %165 = vmatprep.subr.mxu0 0.0
  %166 = vmatpush1.msra.mxu0 %v42
  %167 = vmatprep.subr.mxu0 0.0
  %168 = vmatpush1.msra.mxu0 %v41
  %169 = vmatprep.subr.mxu0 0.0
  %170 = vmatpush1.msra.mxu0 %v40
  %171 = vmatprep.subr.mxu0 0.0
  %172 = vmatpush1.msra.mxu0 %v39
  %173 = vmatprep.subr.mxu0 0.0
  %174 = vmatpush1.msra.mxu0 %v38
  %175 = vmatprep.subr.mxu0 0.0
  %176 = vmatpush1.msra.mxu0 %v37
  %177 = vmatprep.subr.mxu0 0.0
  %178 = vmatpush1.msra.mxu0 %v36
  %179 = vmatprep.subr.mxu0 0.0
  %180 = vmatpush1.msra.mxu0 %v35
  %181 = vmatprep.subr.mxu0 0.0
  %182 = vmatpush1.msra.mxu0 %v34
  %183 = vmatprep.subr.mxu0 0.0
  %184 = vmatpush1.msra.mxu0 %v33
  %185 = vmatprep.subr.mxu0 0.0
  %186 = vmatpush1.msra.mxu0 %v32
  %187 = vmatprep.subr.mxu0 0.0
  %188 = vmatpush1.msra.mxu0 %v31
  %189 = vmatprep.subr.mxu0 0.0
  %190 = vmatpush1.msra.mxu0 %v30
  %191 = vmatprep.subr.mxu0 0.0
  %192 = vmatpush1.msra.mxu0 %v29
  %193 = vmatprep.subr.mxu0 0.0
  %194 = vmatpush1.msra.mxu0 %v28
  %195 = vmatprep.subr.mxu0 0.0
  %196 = vmatpush2.msra.mxu0 %v59
  %197 = vmatprep.subr.mxu0 0.0
  %198 = vmatpush2.msra.mxu0 %v58
  %199 = vmatprep.subr.mxu0 0.0
  %200 = vmatpush2.msra.mxu0 %v57
  %201 = vmatprep.subr.mxu0 0.0
  %202 = vmatpush2.msra.mxu0 %v56
  %203 = vmatprep.subr.mxu0 0.0
  %204 = vmatpush2.msra.mxu0 %v55
  %205 = vmatprep.subr.mxu0 0.0
  %206 = vmatpush2.msra.mxu0 %v54
  %207 = vmatprep.subr.mxu0 0.0
  %208 = vmatpush2.msra.mxu0 %v53
  %209 = vmatprep.subr.mxu0 0.0
  %210 = vmatpush2.msra.mxu0 %v52
  %211 = vmatprep.subr.mxu0 0.0
  %212 = vmatpush2.msra.mxu0 %v51
  %213 = vmatprep.subr.mxu0 0.0
  %214 = vmatpush2.msra.mxu0 %v50
  %215 = vmatprep.subr.mxu0 0.0
  %216 = vmatpush2.msra.mxu0 %v49
  %217 = vmatprep.subr.mxu0 0.0
  %218 = vmatpush2.msra.mxu0 %v48
  %219 = vmatprep.subr.mxu0 0.0
  %220 = vmatpush2.msra.mxu0 %v47
  %221 = vmatprep.subr.mxu0 0.0
  %222 = vmatpush2.msra.mxu0 %v46
  %223 = vmatprep.subr.mxu0 0.0
  %224 = vmatpush2.msra.mxu0 %v45
  %225 = vmatprep.subr.mxu0 0.0
  %226 = vmatpush2.msra.mxu0 %v44
  %227 = vmatprep.mubr.f32.mxu0 %v21
  %228 = vmatmul.mubr.f32.gmra.mxu0 %v20
  %v229 = vpop.f32.mrf.mxu0
  %v230 = vadd.f32 %v161, %v229
  %v231 = vpop.f32.mrf.mxu0
  %232 = vdwg.mxu0
  %233 = vmatprep.subr.mxu0 0.0
  %234 = vmatpush1.msra.mxu0 %v75
  %235 = vmatprep.subr.mxu0 0.0
  %236 = vmatpush1.msra.mxu0 %v74
  %237 = vmatprep.subr.mxu0 0.0
  %238 = vmatpush1.msra.mxu0 %v73
  %239 = vmatprep.subr.mxu0 0.0
  %240 = vmatpush1.msra.mxu0 %v72
  %241 = vmatprep.subr.mxu0 0.0
  %242 = vmatpush1.msra.mxu0 %v71
  %243 = vmatprep.subr.mxu0 0.0
  %244 = vmatpush1.msra.mxu0 %v70
  %245 = vmatprep.subr.mxu0 0.0
  %246 = vmatpush1.msra.mxu0 %v69
  %247 = vmatprep.subr.mxu0 0.0
  %248 = vmatpush1.msra.mxu0 %v68
  %249 = vmatprep.subr.mxu0 0.0
  %250 = vmatpush1.msra.mxu0 %v67
  %251 = vmatprep.subr.mxu0 0.0
  %252 = vmatpush1.msra.mxu0 %v66
  %253 = vmatprep.subr.mxu0 0.0
  %254 = vmatpush1.msra.mxu0 %v65
  %255 = vmatprep.subr.mxu0 0.0
  %256 = vmatpush1.msra.mxu0 %v64
  %257 = vmatprep.subr.mxu0 0.0
  %258 = vmatpush1.msra.mxu0 %v63
  %259 = vmatprep.subr.mxu0 0.0
  %260 = vmatpush1.msra.mxu0 %v62
  %261 = vmatprep.subr.mxu0 0.0
  %262 = vmatpush1.msra.mxu0 %v61
  %263 = vmatprep.subr.mxu0 0.0
  %264 = vmatpush1.msra.mxu0 %v60
  %265 = vmatprep.subr.mxu0 0.0
  %266 = vmatpush2.msra.mxu0 %v91
  %267 = vmatprep.subr.mxu0 0.0
  %268 = vmatpush2.msra.mxu0 %v90
  %269 = vmatprep.subr.mxu0 0.0
  %270 = vmatpush2.msra.mxu0 %v89
  %271 = vmatprep.subr.mxu0 0.0
  %272 = vmatpush2.msra.mxu0 %v88
  %273 = vmatprep.subr.mxu0 0.0
  %274 = vmatpush2.msra.mxu0 %v87
  %275 = vmatprep.subr.mxu0 0.0
  %276 = vmatpush2.msra.mxu0 %v86
  %277 = vmatprep.subr.mxu0 0.0
  %278 = vmatpush2.msra.mxu0 %v85
  %279 = vmatprep.subr.mxu0 0.0
  %280 = vmatpush2.msra.mxu0 %v84
  %281 = vmatprep.subr.mxu0 0.0
  %282 = vmatpush2.msra.mxu0 %v83
  %283 = vmatprep.subr.mxu0 0.0
  %284 = vmatpush2.msra.mxu0 %v82
  %285 = vmatprep.subr.mxu0 0.0
  %286 = vmatpush2.msra.mxu0 %v81
  %287 = vmatprep.subr.mxu0 0.0
  %288 = vmatpush2.msra.mxu0 %v80
  %289 = vmatprep.subr.mxu0 0.0
  %290 = vmatpush2.msra.mxu0 %v79
  %291 = vmatprep.subr.mxu0 0.0
  %292 = vmatpush2.msra.mxu0 %v78
  %293 = vmatprep.subr.mxu0 0.0
  %294 = vmatpush2.msra.mxu0 %v77
  %295 = vmatprep.subr.mxu0 0.0
  %296 = vmatpush2.msra.mxu0 %v76
  %297 = vmatprep.mubr.f32.mxu0 %v23
  %298 = vmatmul.mubr.f32.gmra.mxu0 %v22
  %v299 = vpop.f32.mrf.mxu0
  %v300 = vadd.f32 %v230, %v299
  %v301 = vpop.f32.mrf.mxu0
  %302 = vdwg.mxu0
  %303 = vmatprep.subr.mxu0 0.0
  %304 = vmatpush1.msra.mxu0 %v107
  %305 = vmatprep.subr.mxu0 0.0
  %306 = vmatpush1.msra.mxu0 %v106
  %307 = vmatprep.subr.mxu0 0.0
  %308 = vmatpush1.msra.mxu0 %v105
  %309 = vmatprep.subr.mxu0 0.0
  %310 = vmatpush1.msra.mxu0 %v104
  %311 = vmatprep.subr.mxu0 0.0
  %312 = vmatpush1.msra.mxu0 %v103
  %313 = vmatprep.subr.mxu0 0.0
  %314 = vmatpush1.msra.mxu0 %v102
  %315 = vmatprep.subr.mxu0 0.0
  %316 = vmatpush1.msra.mxu0 %v101
  %317 = vmatprep.subr.mxu0 0.0
  %318 = vmatpush1.msra.mxu0 %v100
  %319 = vmatprep.subr.mxu0 0.0
  %320 = vmatpush1.msra.mxu0 %v99
  %321 = vmatprep.subr.mxu0 0.0
  %322 = vmatpush1.msra.mxu0 %v98
  %323 = vmatprep.subr.mxu0 0.0
  %324 = vmatpush1.msra.mxu0 %v97
  %325 = vmatprep.subr.mxu0 0.0
  %326 = vmatpush1.msra.mxu0 %v96
  %327 = vmatprep.subr.mxu0 0.0
  %328 = vmatpush1.msra.mxu0 %v95
  %329 = vmatprep.subr.mxu0 0.0
  %330 = vmatpush1.msra.mxu0 %v94
  %331 = vmatprep.subr.mxu0 0.0
  %332 = vmatpush1.msra.mxu0 %v93
  %333 = vmatprep.subr.mxu0 0.0
  %334 = vmatpush1.msra.mxu0 %v92
  %335 = vmatprep.subr.mxu0 0.0
  %336 = vmatpush2.msra.mxu0 %v123
  %337 = vmatprep.subr.mxu0 0.0
  %338 = vmatpush2.msra.mxu0 %v122
  %339 = vmatprep.subr.mxu0 0.0
  %340 = vmatpush2.msra.mxu0 %v121
  %341 = vmatprep.subr.mxu0 0.0
  %342 = vmatpush2.msra.mxu0 %v120
  %343 = vmatprep.subr.mxu0 0.0
  %344 = vmatpush2.msra.mxu0 %v119
  %345 = vmatprep.subr.mxu0 0.0
  %346 = vmatpush2.msra.mxu0 %v118
  %347 = vmatprep.subr.mxu0 0.0
  %348 = vmatpush2.msra.mxu0 %v117
  %349 = vmatprep.subr.mxu0 0.0
  %350 = vmatpush2.msra.mxu0 %v116
  %351 = vmatprep.subr.mxu0 0.0
  %352 = vmatpush2.msra.mxu0 %v115
  %353 = vmatprep.subr.mxu0 0.0
  %354 = vmatpush2.msra.mxu0 %v114
  %355 = vmatprep.subr.mxu0 0.0
  %356 = vmatpush2.msra.mxu0 %v113
  %357 = vmatprep.subr.mxu0 0.0
  %358 = vmatpush2.msra.mxu0 %v112
  %359 = vmatprep.subr.mxu0 0.0
  %360 = vmatpush2.msra.mxu0 %v111
  %361 = vmatprep.subr.mxu0 0.0
  %362 = vmatpush2.msra.mxu0 %v110
  %363 = vmatprep.subr.mxu0 0.0
  %364 = vmatpush2.msra.mxu0 %v109
  %365 = vmatprep.subr.mxu0 0.0
  %366 = vmatpush2.msra.mxu0 %v108
  %367 = vmatprep.mubr.f32.mxu0 %v25
  %368 = vmatmul.mubr.f32.gmra.mxu0 %v24
  %v369 = vpop.f32.mrf.mxu0
  %v370 = vadd.f32 %v300, %v369
  %v371 = vpop.f32.mrf.mxu0
  %372 = vdwg.mxu0
  %373 = vmatprep.subr.mxu0 0.0
  %374 = vmatpush1.msra.mxu0 %v139
  %375 = vmatprep.subr.mxu0 0.0
  %376 = vmatpush1.msra.mxu0 %v138
  %377 = vmatprep.subr.mxu0 0.0
  %378 = vmatpush1.msra.mxu0 %v137
  %379 = vmatprep.subr.mxu0 0.0
  %380 = vmatpush1.msra.mxu0 %v136
  %381 = vmatprep.subr.mxu0 0.0
  %382 = vmatpush1.msra.mxu0 %v135
  %383 = vmatprep.subr.mxu0 0.0
  %384 = vmatpush1.msra.mxu0 %v134
  %385 = vmatprep.subr.mxu0 0.0
  %386 = vmatpush1.msra.mxu0 %v133
  %387 = vmatprep.subr.mxu0 0.0
  %388 = vmatpush1.msra.mxu0 %v132
  %389 = vmatprep.subr.mxu0 0.0
  %390 = vmatpush1.msra.mxu0 %v131
  %391 = vmatprep.subr.mxu0 0.0
  %392 = vmatpush1.msra.mxu0 %v130
  %393 = vmatprep.subr.mxu0 0.0
  %394 = vmatpush1.msra.mxu0 %v129
  %395 = vmatprep.subr.mxu0 0.0
  %396 = vmatpush1.msra.mxu0 %v128
  %397 = vmatprep.subr.mxu0 0.0
  %398 = vmatpush1.msra.mxu0 %v127
  %399 = vmatprep.subr.mxu0 0.0
  %400 = vmatpush1.msra.mxu0 %v126
  %401 = vmatprep.subr.mxu0 0.0
  %402 = vmatpush1.msra.mxu0 %v125
  %403 = vmatprep.subr.mxu0 0.0
  %404 = vmatpush1.msra.mxu0 %v124
  %405 = vmatprep.subr.mxu0 0.0
  %406 = vmatpush2.msra.mxu0 %v155
  %407 = vmatprep.subr.mxu0 0.0
  %408 = vmatpush2.msra.mxu0 %v154
  %409 = vmatprep.subr.mxu0 0.0
  %410 = vmatpush2.msra.mxu0 %v153
  %411 = vmatprep.subr.mxu0 0.0
  %412 = vmatpush2.msra.mxu0 %v152
  %413 = vmatprep.subr.mxu0 0.0
  %414 = vmatpush2.msra.mxu0 %v151
  %415 = vmatprep.subr.mxu0 0.0
  %416 = vmatpush2.msra.mxu0 %v150
  %417 = vmatprep.subr.mxu0 0.0
  %418 = vmatpush2.msra.mxu0 %v149
  %419 = vmatprep.subr.mxu0 0.0
  %420 = vmatpush2.msra.mxu0 %v148
  %421 = vmatprep.subr.mxu0 0.0
  %422 = vmatpush2.msra.mxu0 %v147
  %423 = vmatprep.subr.mxu0 0.0
  %424 = vmatpush2.msra.mxu0 %v146
  %425 = vmatprep.subr.mxu0 0.0
  %426 = vmatpush2.msra.mxu0 %v145
  %427 = vmatprep.subr.mxu0 0.0
  %428 = vmatpush2.msra.mxu0 %v144
  %429 = vmatprep.subr.mxu0 0.0
  %430 = vmatpush2.msra.mxu0 %v143
  %431 = vmatprep.subr.mxu0 0.0
  %432 = vmatpush2.msra.mxu0 %v142
  %433 = vmatprep.subr.mxu0 0.0
  %434 = vmatpush2.msra.mxu0 %v141
  %435 = vmatprep.subr.mxu0 0.0
  %436 = vmatpush2.msra.mxu0 %v140
  %437 = vmatprep.mubr.f32.mxu0 %v27
  %438 = vmatmul.mubr.f32.gmra.mxu0 %v26
  %v439 = vpop.f32.mrf.mxu0
  %v440 = vadd.f32 %v370, %v439
  %v441 = vpop.f32.mrf.mxu0
  %442 = vdwg.mxu0
  %vm443 = vcmp.gt.f32.partialorder %v440, 0.0
  %v444 = vsel %vm443, 1.0, -1.0
  %v445 = vld [vmem:[%s3] sm:$0xff]
  %vm446 = vcmask 64512
  %v448 = vsel %vm446, %v444, 0
  %450 = vmatprep.subr.mxu0 0.0
  %451 = vmatpush1.msra.mxu0 0.0
  %452 = vmatprep.subr.mxu0 0.0
  %453 = vmatpush1.msra.mxu0 0.0
  %454 = vmatprep.subr.mxu0 0.0
  %455 = vmatpush1.msra.mxu0 0.0
  %456 = vmatprep.subr.mxu0 0.0
  %457 = vmatpush1.msra.mxu0 0.0
  %458 = vmatprep.subr.mxu0 0.0
  %459 = vmatpush1.msra.mxu0 0.0
  %460 = vmatprep.subr.mxu0 0.0
  %461 = vmatpush1.msra.mxu0 0.0
  %462 = vmatprep.subr.mxu0 0.0
  %463 = vmatpush1.msra.mxu0 0.0
  %464 = vmatprep.subr.mxu0 0.0
  %465 = vmatpush1.msra.mxu0 0.0
  %466 = vmatprep.subr.mxu0 0.0
  %467 = vmatpush1.msra.mxu0 0.0
  %468 = vmatprep.subr.mxu0 0.0
  %469 = vmatpush1.msra.mxu0 0.0
  %470 = vmatprep.subr.mxu0 0.0
  %471 = vmatpush1.msra.mxu0 0.0
  %472 = vmatprep.subr.mxu0 0.0
  %473 = vmatpush1.msra.mxu0 0.0
  %474 = vmatprep.subr.mxu0 0.0
  %475 = vmatpush1.msra.mxu0 0.0
  %476 = vmatprep.subr.mxu0 0.0
  %477 = vmatpush1.msra.mxu0 0.0
  %478 = vmatprep.subr.mxu0 0.0
  %479 = vmatpush1.msra.mxu0 0.0
  %480 = vmatprep.subr.mxu0 0.0
  %481 = vmatpush1.msra.mxu0 %v445
  %482 = vmatprep.subr.mxu0 0.0
  %483 = vmatpush2.msra.mxu0 0.0
  %484 = vmatprep.subr.mxu0 0.0
  %485 = vmatpush2.msra.mxu0 0.0
  %486 = vmatprep.subr.mxu0 0.0
  %487 = vmatpush2.msra.mxu0 0.0
  %488 = vmatprep.subr.mxu0 0.0
  %489 = vmatpush2.msra.mxu0 0.0
  %490 = vmatprep.subr.mxu0 0.0
  %491 = vmatpush2.msra.mxu0 0.0
  %492 = vmatprep.subr.mxu0 0.0
  %493 = vmatpush2.msra.mxu0 0.0
  %494 = vmatprep.subr.mxu0 0.0
  %495 = vmatpush2.msra.mxu0 0.0
  %496 = vmatprep.subr.mxu0 0.0
  %497 = vmatpush2.msra.mxu0 0.0
  %498 = vmatprep.subr.mxu0 0.0
  %499 = vmatpush2.msra.mxu0 0.0
  %500 = vmatprep.subr.mxu0 0.0
  %501 = vmatpush2.msra.mxu0 0.0
  %502 = vmatprep.subr.mxu0 0.0
  %503 = vmatpush2.msra.mxu0 0.0
  %504 = vmatprep.subr.mxu0 0.0
  %505 = vmatpush2.msra.mxu0 0.0
  %506 = vmatprep.subr.mxu0 0.0
  %507 = vmatpush2.msra.mxu0 0.0
  %508 = vmatprep.subr.mxu0 0.0
  %509 = vmatpush2.msra.mxu0 0.0
  %510 = vmatprep.subr.mxu0 0.0
  %511 = vmatpush2.msra.mxu0 0.0
  %512 = vmatprep.subr.mxu0 0.0
  %513 = vmatpush2.msra.mxu0 0.0
  %514 = vmatprep.mubr.f32.mxu0 0.0
  %515 = vmatmul.mubr.f32.gmra.mxu0 %v448
  %v516 = vpop.f32.mrf.mxu0
  %v517 = vadd.f32 0.0, %v516
  %v518 = vpop.f32.mrf.mxu0
  %519 = vdwg.mxu0
  %v520 = vld [vmem:[%s4] sm:$0x1]
  %v522 = vlaneseq
  %v523 = vshrl.u32 %v522, 7
  %v524 = vsub.s32 0, %v523
  %v525 = vrot.slane %v520, %v524
  %vm527 = vcmp.eq.f32.partialorder %v517, %v525
  %v528 = vsel %vm527, 1, 0
  %v529 = vcvt.s32.f32 %v528
  %530 = vst [vmem:[%s5] sm:$0xff] %v529
  // Predicated region
  $region22: #{nbdt_forward.1} parent=0 // pred_check
    _
  $region23: #{nbdt_forward.1} parent=0 // pred_check_branch
    %532 = sbr.rel (0) target = $region25
  $region24: #{nbdt_forward.1} parent=0 // pred_region
    _
  $region25: #{nbdt_forward.1} parent=0 // pred_fallthru
    _
  // Predicated region
  $region26: #{nbdt_forward.1} parent=0 // pred_check
    _
  $region27: #{nbdt_forward.1} parent=0 // pred_check_branch
    %534 = sbr.rel (0) target = $region29
  $region28: #{nbdt_forward.1} parent=0 // pred_region
    _
  $region29: #{nbdt_forward.1} parent=0 // pred_fallthru
    _

</llo_original>
